<compile_context>
chip_gen: v5e
topology: v5e:2x2
jax: 0.10.0
libtpu: 0.0.40
codegen_flags: <defaults>
</compile_context>

<pallas_src>
import math

import jax
import jax.numpy as jnp
from jax import lax
from jax.experimental import pallas as pl
from jax.experimental.pallas import tpu as pltpu

LANE = 128
A_SUBLANE = 16  # action rows padded to one bf16 sublane tile


def _round_up(x, m):
    return ((x + m - 1) // m) * m


def _default_act_dtype():
    """bf16 elementwise path only where the VPU/EUP support it (v6e / v7x)."""
    try:
        kind = jax.devices()[0].device_kind.lower()
    except Exception:
        return jnp.float32
    if "v6" in kind or "v7" in kind:
        return jnp.bfloat16
    return jnp.float32


# ----------------------------- kernel ---------------------------------------

def policy_kernel(x_ref, w1_ref, w2_ref, w3t_ref, b12_ref, b3t_ref, out_ref):
    """Fused 3-layer tanh MLP + output tanh, action-major output.

    x_ref   : (TILE_B, S)      states (native dtype, cast to bf16 in-kernel)
    w1_ref  : (S, Hp)          bf16, zero-padded to 128 lanes
    w2_ref  : (Hp, Hp)         bf16
    w3t_ref : (Ap, Hp)         bf16, layer-3 weights stored transposed
    b12_ref : (2, Hp)          act dtype (f32 on v5e, bf16 on v6e/v7x)
    b3t_ref : (Ap, 1)          act dtype
    out_ref : (Ap, TILE_B)     bf16, batch on the lane axis (lane-dense stores)
    """
    mm = w1_ref.dtype            # matmul operand dtype (bf16)
    act = b12_ref.dtype          # elementwise / tanh dtype

    x = x_ref[...].astype(mm)

    # Layer 1: MXU matmul with f32 accumulation; bias + tanh in `act`.
    h = jnp.dot(x, w1_ref[...], preferred_element_type=jnp.float32)
    h = jnp.tanh(h.astype(act) + b12_ref[0:1, :])

    # Layer 2.
    h = jnp.dot(h.astype(mm), w2_ref[...], preferred_element_type=jnp.float32)
    h = jnp.tanh(h.astype(act) + b12_ref[1:2, :])

    # Layer 3, action-major: (Ap, Hp) x (TILE_B, Hp) contracted on Hp
    # -> (Ap, TILE_B).  NT matmul on the MXU, no materialized transpose.
    y = lax.dot_general(w3t_ref[...], h.astype(mm),
                        (((1,), (1,)), ((), ())),
                        preferred_element_type=jnp.float32)
    out_ref[...] = jnp.tanh(y.astype(act) + b3t_ref[...]).astype(out_ref.dtype)


# ----------------------------- wrappers --------------------------------------

def prepare_policy_params(params, *, matmul_dtype=jnp.bfloat16,
                          act_dtype=jnp.float32):
    """One-time padding/casting of the MLP parameters (hoisted out of forward)."""
    w1, b1, w2, b2, w3, b3 = params
    S, H = w1.shape
    A = w3.shape[1]
    hp = _round_up(H, LANE)
    ap = _round_up(A, A_SUBLANE)

    w1p = jnp.zeros((S, hp), matmul_dtype).at[:, :H].set(w1.astype(matmul_dtype))
    w2p = jnp.zeros((hp, hp), matmul_dtype).at[:H, :H].set(w2.astype(matmul_dtype))
    # Layer-3 weights stored transposed (action-major rows), zero-padded.
    w3t = jnp.zeros((ap, hp), matmul_dtype).at[:A, :H].set(
        w3.T.astype(matmul_dtype))

    b12 = jnp.zeros((2, hp), act_dtype)
    b12 = b12.at[0, :H].set(b1.reshape(-1).astype(act_dtype))
    b12 = b12.at[1, :H].set(b2.reshape(-1).astype(act_dtype))
    b3t = jnp.zeros((ap, 1), act_dtype).at[:A, 0].set(
        b3.reshape(-1).astype(act_dtype))

    return dict(w1p=w1p, w2p=w2p, w3t=w3t, b12=b12, b3t=b3t,
                S=S, H=H, A=A, hp=hp, ap=ap)


def state_independent_policy_forward(states, prepared, *, tile_b=8192,
                                     out_dtype=jnp.bfloat16):
    """tanh(MLP(states)) — forward pass of StateIndependentPolicy. Returns (B, A)."""
    B, S = states.shape
    assert S == prepared["S"], (S, prepared["S"])
    hp, ap, A = prepared["hp"], prepared["ap"], prepared["A"]

    # Batch tile: multiple of 128 (batch rides the lane axis of the output) and
    # at most ceil(B/2) rounded up -> >=2 grid steps for mid/large B so both
    # v7x TensorCores get work.  Small B collapses to a single tiny step.
    tile_b = int(min(tile_b, max(LANE, _round_up((B + 1) // 2, LANE))))
    bp = _round_up(B, tile_b)
    x = states
    if bp != B:
        x = jnp.pad(x, ((0, bp - B), (0, 0)))

    grid = (bp // tile_b,)
    const = lambda i: (0, 0)  # same block every step => weights stay VMEM-resident

    out = pl.pallas_call(
        policy_kernel,
        out_shape=jax.ShapeDtypeStruct((ap, bp), out_dtype),
        grid=grid,
        in_specs=[
            pl.BlockSpec((tile_b, S), lambda i: (i, 0)),   # streamed batch tile
            pl.BlockSpec((S, hp), const),
            pl.BlockSpec((hp, hp), const),
            pl.BlockSpec((ap, hp), const),
            pl.BlockSpec((2, hp), const),
            pl.BlockSpec((ap, 1), const),
        ],
        out_specs=pl.BlockSpec((ap, tile_b), lambda i: (0, i)),
        compiler_params=pltpu.CompilerParams(
            dimension_semantics=(pltpu.PARALLEL,),   # shard batch axis over TCs
            vmem_limit_bytes=48 * 1024 * 1024,       # fits v7x's 64 MiB per-TC VMEM
        ),
    )(x, prepared["w1p"], prepared["w2p"], prepared["w3t"],
      prepared["b12"], prepared["b3t"])

    # Tiny (ap, bp) bf16 slab -> (B, A); negligible vs. the old padded f32 slab.
    return out[:A, :B].T


# ---------------- init + reference (PyTorch-equivalent) ----------------

def init_linear(key, in_dim, out_dim):
    """PyTorch nn.Linear default init: U(-1/sqrt(fan_in), 1/sqrt(fan_in))."""
    kw, kb = jax.random.split(key)
    bound = 1.0 / math.sqrt(in_dim)
    w = jax.random.uniform(kw, (in_dim, out_dim), jnp.float32, -bound, bound)
    b = jax.random.uniform(kb, (out_dim,), jnp.float32, -bound, bound)
    return w, b


def init_policy_params(key, state_dim, action_dim, hidden=(64, 64)):
    dims = [state_dim, *hidden, action_dim]
    params = []
    keys = jax.random.split(key, len(dims) - 1)
    for k, din, dout in zip(keys, dims[:-1], dims[1:]):
        w, b = init_linear(k, din, dout)
        params += [w, b]
    return params


def reference_forward(states, params):
    """Pure-JAX f32 reference of StateIndependentPolicy.forward."""
    w1, b1, w2, b2, w3, b3 = params
    h = jnp.tanh(states @ w1 + b1)
    h = jnp.tanh(h @ w2 + b2)
    return jnp.tanh(h @ w3 + b3)


if __name__ == "__main__":
    B = 64
    STATE_DIM = 11   # Hopper-style observation dim
    ACTION_DIM = 3   # Hopper-style action dim
    HIDDEN = (64, 64)

    key = jax.random.PRNGKey(0)
    k_s, k_p = jax.random.split(key)
    states = jax.random.normal(k_s, (B, STATE_DIM), jnp.float32)
    params = init_policy_params(k_p, STATE_DIM, ACTION_DIM, HIDDEN)

    # Parameter padding/casting done once (not per forward call).
    prepared = prepare_policy_params(params, act_dtype=_default_act_dtype())

    out = state_independent_policy_forward(states, prepared)
    out = jax.block_until_ready(out)

    ref = reference_forward(states, params)
    assert out.shape == (B, ACTION_DIM), out.shape
    # bf16 matmul operands + bf16 output (and bf16 tanh on v6e/v7x) vs f32 ref.
    err = float(jnp.max(jnp.abs(out.astype(jnp.float32) - ref)))
    assert err < 4e-2, err
    print("KERNEL_OK")
</pallas_src>

<mosaic_0001>
module attributes {stable_mosaic.version = 11 : i64} {
  func.func @policy_kernel(%arg0: i32, %arg1: memref<128x11xf32, #tpu.memory_space<vmem>>, %arg2: memref<11x128xbf16, #tpu.memory_space<vmem>>, %arg3: memref<128x128xbf16, #tpu.memory_space<vmem>>, %arg4: memref<16x128xbf16, #tpu.memory_space<vmem>>, %arg5: memref<2x128xf32, #tpu.memory_space<vmem>>, %arg6: memref<16x1xf32, #tpu.memory_space<vmem>>, %arg7: memref<16x128xbf16, #tpu.memory_space<vmem>>) attributes {dimension_semantics = [#tpu.dimension_semantics<parallel>], iteration_bounds = array<i64: 1>, scalar_prefetch = 0 : i64, scratch_operands = 0 : i64, tpu.core_type = #tpu.core_type<tc>, window_params = [{transform_indices = @transform_0, window_bounds = array<i64: 128, 11>}, {pipeline_mode = #tpu.pipeline_mode<synchronous>, transform_indices = @transform_1, window_bounds = array<i64: 11, 128>}, {pipeline_mode = #tpu.pipeline_mode<synchronous>, transform_indices = @transform_2, window_bounds = array<i64: 128, 128>}, {pipeline_mode = #tpu.pipeline_mode<synchronous>, transform_indices = @transform_3, window_bounds = array<i64: 16, 128>}, {pipeline_mode = #tpu.pipeline_mode<synchronous>, transform_indices = @transform_4, window_bounds = array<i64: 2, 128>}, {pipeline_mode = #tpu.pipeline_mode<synchronous>, transform_indices = @transform_5, window_bounds = array<i64: 16, 1>}, {transform_indices = @transform_6, window_bounds = array<i64: 16, 128>}]} {
    %c0 = arith.constant 0 : index
    %c0_0 = arith.constant 0 : index
    %0 = vector.load %arg1[%c0, %c0_0] : memref<128x11xf32, #tpu.memory_space<vmem>>, vector<128x11xf32>
    %1 = arith.truncf %0 : vector<128x11xf32> to vector<128x11xbf16>
    %c0_1 = arith.constant 0 : index
    %c0_2 = arith.constant 0 : index
    %2 = vector.load %arg2[%c0_1, %c0_2] : memref<11x128xbf16, #tpu.memory_space<vmem>>, vector<11x128xbf16>
    %cst = arith.constant dense<0.000000e+00> : vector<128x128xf32>
    %3 = tpu.matmul %1, %2, %cst {dimension_numbers = #tpu.dot_dimension_numbers<[1], [0], [0], [1], [0, 0, 1, 1], [], []>} : vector<128x11xbf16>, vector<11x128xbf16>, vector<128x128xf32> -> vector<128x128xf32>
    %c0_3 = arith.constant 0 : index
    %c0_4 = arith.constant 0 : index
    %4 = vector.load %arg5[%c0_3, %c0_4] : memref<2x128xf32, #tpu.memory_space<vmem>>, vector<1x128xf32>
    %5 = vector.broadcast %4 : vector<1x128xf32> to vector<128x128xf32>
    %6 = arith.addf %3, %5 : vector<128x128xf32>
    %7 = math.tanh %6 : vector<128x128xf32>
    %8 = arith.truncf %7 : vector<128x128xf32> to vector<128x128xbf16>
    %c0_5 = arith.constant 0 : index
    %c0_6 = arith.constant 0 : index
    %9 = vector.load %arg3[%c0_5, %c0_6] : memref<128x128xbf16, #tpu.memory_space<vmem>>, vector<128x128xbf16>
    %cst_7 = arith.constant dense<0.000000e+00> : vector<128x128xf32>
    %10 = tpu.matmul %8, %9, %cst_7 {dimension_numbers = #tpu.dot_dimension_numbers<[1], [0], [0], [1], [0, 0, 1, 1], [], []>} : vector<128x128xbf16>, vector<128x128xbf16>, vector<128x128xf32> -> vector<128x128xf32>
    %c1 = arith.constant 1 : index
    %c0_8 = arith.constant 0 : index
    %11 = vector.load %arg5[%c1, %c0_8] : memref<2x128xf32, #tpu.memory_space<vmem>>, vector<1x128xf32>
    %12 = vector.broadcast %11 : vector<1x128xf32> to vector<128x128xf32>
    %13 = arith.addf %10, %12 : vector<128x128xf32>
    %14 = math.tanh %13 : vector<128x128xf32>
    %c0_9 = arith.constant 0 : index
    %c0_10 = arith.constant 0 : index
    %15 = vector.load %arg4[%c0_9, %c0_10] : memref<16x128xbf16, #tpu.memory_space<vmem>>, vector<16x128xbf16>
    %16 = arith.truncf %14 : vector<128x128xf32> to vector<128x128xbf16>
    %cst_11 = arith.constant dense<0.000000e+00> : vector<16x128xf32>
    %17 = tpu.matmul %15, %16, %cst_11 {dimension_numbers = #tpu.dot_dimension_numbers<[1], [1], [0], [0], [0, 0, 1, 0], [], []>} : vector<16x128xbf16>, vector<128x128xbf16>, vector<16x128xf32> -> vector<16x128xf32>
    %c0_12 = arith.constant 0 : index
    %c0_13 = arith.constant 0 : index
    %18 = vector.load %arg6[%c0_12, %c0_13] : memref<16x1xf32, #tpu.memory_space<vmem>>, vector<16x1xf32>
    %19 = vector.broadcast %18 : vector<16x1xf32> to vector<16x128xf32>
    %20 = arith.addf %17, %19 : vector<16x128xf32>
    %21 = math.tanh %20 : vector<16x128xf32>
    %22 = arith.truncf %21 : vector<16x128xf32> to vector<16x128xbf16>
    %c0_14 = arith.constant 0 : index
    %c0_15 = arith.constant 0 : index
    %23 = vector.load %arg7[%c0_14, %c0_15] : memref<16x128xbf16, #tpu.memory_space<vmem>>, vector<16x128xbf16>
    tpu.vector_store %arg7[%c0_14, %c0_15], %22 {strides = array<i32>} : memref<16x128xbf16, #tpu.memory_space<vmem>>, vector<16x128xbf16>,
    return
  }
  func.func @transform_0(%arg0: i32) -> (i32, i32) {
    %c0_i32 = arith.constant 0 : i32
    %c0_i32_0 = arith.constant 0 : i32
    return %arg0, %c0_i32 : i32, i32
  }
  func.func @transform_1(%arg0: i32) -> (i32, i32) {
    %c0_i32 = arith.constant 0 : i32
    %c0_i32_0 = arith.constant 0 : i32
    %c0_i32_1 = arith.constant 0 : i32
    return %c0_i32, %c0_i32_0 : i32, i32
  }
  func.func @transform_2(%arg0: i32) -> (i32, i32) {
    %c0_i32 = arith.constant 0 : i32
    %c0_i32_0 = arith.constant 0 : i32
    %c0_i32_1 = arith.constant 0 : i32
    return %c0_i32, %c0_i32_0 : i32, i32
  }
  func.func @transform_3(%arg0: i32) -> (i32, i32) {
    %c0_i32 = arith.constant 0 : i32
    %c0_i32_0 = arith.constant 0 : i32
    %c0_i32_1 = arith.constant 0 : i32
    return %c0_i32, %c0_i32_0 : i32, i32
  }
  func.func @transform_4(%arg0: i32) -> (i32, i32) {
    %c0_i32 = arith.constant 0 : i32
    %c0_i32_0 = arith.constant 0 : i32
    %c0_i32_1 = arith.constant 0 : i32
    return %c0_i32, %c0_i32_0 : i32, i32
  }
  func.func @transform_5(%arg0: i32) -> (i32, i32) {
    %c0_i32 = arith.constant 0 : i32
    %c0_i32_0 = arith.constant 0 : i32
    %c0_i32_1 = arith.constant 0 : i32
    return %c0_i32, %c0_i32_0 : i32, i32
  }
  func.func @transform_6(%arg0: i32) -> (i32, i32) {
    %c0_i32 = arith.constant 0 : i32
    %c0_i32_0 = arith.constant 0 : i32
    return %c0_i32, %arg0 : i32, i32
  }
}

</mosaic_0001>

<llo_original>
// kernel: tpu_custom_call.1
$region0: #{tpu_custom_call.1}
  #allocation0 [shape = 'u32[]', space=smem, size = 0x4, offset = 0x4, fixed_abs, tag = 'smem constant byte address 0x4 - core index']
  #allocation1 [shape = 'u32[72,128]{1,0:T(1,128)}', space=vmem, size = 0x9000, scoped, tag = 'internal scratch']
  %s0 = inlined_call_operand.vmem [shape: f32[128,11], index: 0, kind: input, shape index: {}]
  %s1 = inlined_call_operand.vmem [shape: bf16[11,128], index: 1, kind: input, shape index: {}]
  %s2 = inlined_call_operand.vmem [shape: bf16[128,128], index: 2, kind: input, shape index: {}]
  %s3 = inlined_call_operand.vmem [shape: bf16[16,128], index: 3, kind: input, shape index: {}]
  %s4 = inlined_call_operand.vmem [shape: f32[2,128], index: 4, kind: input, shape index: {}]
  %s5 = inlined_call_operand.vmem [shape: f32[16,1], index: 5, kind: input, shape index: {}]
  %s6 = inlined_call_operand.hbm [shape: bf16[16,128], index: 6, kind: output, shape index: {}]
  %s7 = sld [smem:[#allocation0]]
  $region34: #{tpu_custom_call.1} parent=0
    _
  %s9 = ssub.s32 1, %s7
  %s10 = scalar_select 0, %s9, %s7
  $region1: #{tpu_custom_call.1} parent=0
    #allocation2 [shape = 'u8[4096]{0}', space=vmem, size = 0x1000, scoped, tag = 'output window, operand 0, single buffered']
    #allocation3 [shape = 's32[1]{0}', space=sflag, size = 0x4, scoped, tag = 'scoped memory for tpu_custom_call.1']
    %11 = vsyncpa [#allocation3], 0
    // Predicated region
    $region2: #{tpu_custom_call.1} parent=1 // pred_check
      _
    $region3: #{tpu_custom_call.1} parent=1 // pred_check_branch
      %13 = sbr.rel (0) target = $region5
    $region4: #{tpu_custom_call.1} parent=1 // pred_region
      _
    $region5: #{tpu_custom_call.1} parent=1 // pred_fallthru
      _
    // Predicated region
    $region6: #{tpu_custom_call.1} parent=1 // pred_check
      _
    $region7: #{tpu_custom_call.1} parent=1 // pred_check_branch
      %15 = sbr.rel (0) target = $region9
    $region8: #{tpu_custom_call.1} parent=1 // pred_region
      _
    $region9: #{tpu_custom_call.1} parent=1 // pred_fallthru
      _
    // Predicated region
    $region10: #{tpu_custom_call.1} parent=1 // pred_check
      _
    $region11: #{tpu_custom_call.1} parent=1 // pred_check_branch
      %17 = sbr.rel (0) target = $region13
    $region12: #{tpu_custom_call.1} parent=1 // pred_region
      _
    $region13: #{tpu_custom_call.1} parent=1 // pred_fallthru
      _
    // Predicated region
    $region14: #{tpu_custom_call.1} parent=1 // pred_check
      _
    $region15: #{tpu_custom_call.1} parent=1 // pred_check_branch
      %19 = sbr.rel (0) target = $region17
    $region16: #{tpu_custom_call.1} parent=1 // pred_region
      _
    $region17: #{tpu_custom_call.1} parent=1 // pred_fallthru
      _
    // Predicated region
    $region18: #{tpu_custom_call.1} parent=1 // pred_check
      _
    $region19: #{tpu_custom_call.1} parent=1 // pred_check_branch
      %21 = sbr.rel (0) target = $region21
    $region20: #{tpu_custom_call.1} parent=1 // pred_region
      _
    $region21: #{tpu_custom_call.1} parent=1 // pred_fallthru
      _
    // Predicated region
    $region22: #{tpu_custom_call.1} parent=1 // pred_check
      _
    $region23: #{tpu_custom_call.1} parent=1 // pred_check_branch
      %23 = sbr.rel (0) target = $region25
    $region24: #{tpu_custom_call.1} parent=1 // pred_region
      _
    $region25: #{tpu_custom_call.1} parent=1 // pred_fallthru
      _
    %v25 = vld [vmem:[%s0] sm:$0xff]
    %v26 = vld [vmem:[%s0 + $0x8] sm:$0xff]
    %v27 = vld [vmem:[%s0 + $0x10] sm:$0xff]
    %v28 = vld [vmem:[%s0 + $0x18] sm:$0xff]
    %v29 = vld [vmem:[%s0 + $0x20] sm:$0xff]
    %v30 = vld [vmem:[%s0 + $0x28] sm:$0xff]
    %v31 = vld [vmem:[%s0 + $0x30] sm:$0xff]
    %v32 = vld [vmem:[%s0 + $0x38] sm:$0xff]
    %v33 = vld [vmem:[%s0 + $0x40] sm:$0xff]
    %v34 = vld [vmem:[%s0 + $0x48] sm:$0xff]
    %v35 = vld [vmem:[%s0 + $0x50] sm:$0xff]
    %v36 = vld [vmem:[%s0 + $0x58] sm:$0xff]
    %v37 = vld [vmem:[%s0 + $0x60] sm:$0xff]
    %v38 = vld [vmem:[%s0 + $0x68] sm:$0xff]
    %v39 = vld [vmem:[%s0 + $0x70] sm:$0xff]
    %v40 = vld [vmem:[%s0 + $0x78] sm:$0xff]
    %v41 = vpack.c.bf16 %v26, %v25
    %v42 = vpack.c.bf16 %v28, %v27
    %v43 = vpack.c.bf16 %v30, %v29
    %v44 = vpack.c.bf16 %v32, %v31
    %v45 = vpack.c.bf16 %v34, %v33
    %v46 = vpack.c.bf16 %v36, %v35
    %v47 = vpack.c.bf16 %v38, %v37
    %v48 = vpack.c.bf16 %v40, %v39
    %v49 = vld [vmem:[%s1] sm:$0xf]
    %v50 = vld [vmem:[%s1 + $0x4] sm:$0x3]
    %v51 = vld [vmem:[%s4] sm:$0x1]
    %v52 = vperm.slane %v51, 0
    %v55 = vunpack.c.l.b16 %v49
    %v56 = vunpack.c.l.b16 %v50
    %v57 = vpack.c.b16 %v56, %v55
    %vm58 = vcmask 89088
    %v60 = vsel %vm58, %v41, 0
    %v63 = vsel %vm58, %v42, 0
    %v66 = vsel %vm58, %v43, 0
    %v69 = vsel %vm58, %v44, 0
    %v72 = vsel %vm58, %v45, 0
    %v75 = vsel %vm58, %v46, 0
    %v78 = vsel %vm58, %v47, 0
    %v81 = vsel %vm58, %v48, 0
    %vm83 = vcmask 1044480
    %vm84 = vcmask 1045504
    %v85 = vsel %vm83, 4294967295, 65535
    %v86 = vsel %vm84, %v85, 0
    %v88 = vand.u32 %v57, %v86
    %90 = vmatpush.bf16.msra.mxu0 0
    %91 = vmatpush.bf16.msra.mxu0 0
    %92 = vmatpush.bf16.msra.mxu0 0
    %93 = vmatpush.bf16.msra.mxu0 0
    %94 = vmatpush.bf16.msra.mxu0 0
    %95 = vmatpush.bf16.msra.mxu0 0
    %96 = vmatpush.bf16.msra.mxu0 0
    %97 = vmatpush.bf16.msra.mxu0 %v88
    %98 = vmatmul.bf16.gmra.mxu0 %v60
    %v99 = vpop.f32.mrf.mxu0
    %v100 = vadd.f32 %v52, %v99
    %v101 = vpop.f32.mrf.mxu0
    %v102 = vadd.f32 %v52, %v101
    %103 = vmatmul.bf16.gmra.mxu0 %v63
    %v104 = vpop.f32.mrf.mxu0
    %v105 = vadd.f32 %v52, %v104
    %v106 = vpop.f32.mrf.mxu0
    %v107 = vadd.f32 %v52, %v106
    %108 = vmatmul.bf16.gmra.mxu0 %v66
    %v109 = vpop.f32.mrf.mxu0
    %v110 = vadd.f32 %v52, %v109
    %v111 = vpop.f32.mrf.mxu0
    %v112 = vadd.f32 %v52, %v111
    %113 = vmatmul.bf16.gmra.mxu0 %v69
    %v114 = vpop.f32.mrf.mxu0
    %v115 = vadd.f32 %v52, %v114
    %v116 = vpop.f32.mrf.mxu0
    %v117 = vadd.f32 %v52, %v116
    %118 = vmatmul.bf16.gmra.mxu0 %v72
    %v119 = vpop.f32.mrf.mxu0
    %v120 = vadd.f32 %v52, %v119
    %v121 = vpop.f32.mrf.mxu0
    %v122 = vadd.f32 %v52, %v121
    %123 = vmatmul.bf16.gmra.mxu0 %v75
    %v124 = vpop.f32.mrf.mxu0
    %v125 = vadd.f32 %v52, %v124
    %v126 = vpop.f32.mrf.mxu0
    %v127 = vadd.f32 %v52, %v126
    %128 = vmatmul.bf16.gmra.mxu0 %v78
    %v129 = vpop.f32.mrf.mxu0
    %v130 = vadd.f32 %v52, %v129
    %v131 = vpop.f32.mrf.mxu0
    %v132 = vadd.f32 %v52, %v131
    %133 = vmatmul.bf16.gmra.mxu0 %v81
    %v134 = vpop.f32.mrf.mxu0
    %v135 = vadd.f32 %v52, %v134
    %v136 = vpop.f32.mrf.mxu0
    %v137 = vadd.f32 %v52, %v136
    %138 = vdwg.mxu0
    %v139 = vtanh.pop %v100
    %v140 = vtanh.pop %v102
    %v141 = vtanh.pop %v105
    %v142 = vtanh.pop %v107
    %v143 = vtanh.pop %v110
    %v144 = vtanh.pop %v112
    %v145 = vtanh.pop %v115
    %v146 = vtanh.pop %v117
    %v147 = vtanh.pop %v120
    %v148 = vtanh.pop %v122
    %v149 = vtanh.pop %v125
    %v150 = vtanh.pop %v127
    %v151 = vtanh.pop %v130
    %v152 = vtanh.pop %v132
    %v153 = vtanh.pop %v135
    %v154 = vtanh.pop %v137
    %v155 = vpack.c.bf16 %v140, %v139
    %v156 = vpack.c.bf16 %v142, %v141
    %v157 = vpack.c.bf16 %v144, %v143
    %v158 = vpack.c.bf16 %v146, %v145
    %v159 = vpack.c.bf16 %v148, %v147
    %v160 = vpack.c.bf16 %v150, %v149
    %v161 = vpack.c.bf16 %v152, %v151
    %v162 = vpack.c.bf16 %v154, %v153
    %v163 = vld [vmem:[%s2] sm:$0xf]
    %v164 = vld [vmem:[%s2 + $0x4] sm:$0xf]
    %v165 = vld [vmem:[%s2 + $0x8] sm:$0xf]
    %v166 = vld [vmem:[%s2 + $0xc] sm:$0xf]
    %v167 = vld [vmem:[%s2 + $0x10] sm:$0xf]
    %v168 = vld [vmem:[%s2 + $0x14] sm:$0xf]
    %v169 = vld [vmem:[%s2 + $0x18] sm:$0xf]
    %v170 = vld [vmem:[%s2 + $0x1c] sm:$0xf]
    %v171 = vld [vmem:[%s2 + $0x20] sm:$0xf]
    %v172 = vld [vmem:[%s2 + $0x24] sm:$0xf]
    %v173 = vld [vmem:[%s2 + $0x28] sm:$0xf]
    %v174 = vld [vmem:[%s2 + $0x2c] sm:$0xf]
    %v175 = vld [vmem:[%s2 + $0x30] sm:$0xf]
    %v176 = vld [vmem:[%s2 + $0x34] sm:$0xf]
    %v177 = vld [vmem:[%s2 + $0x38] sm:$0xf]
    %v178 = vld [vmem:[%s2 + $0x3c] sm:$0xf]
    %v179 = vld [vmem:[%s4 + $0x1] sm:$0x1]
    %v180 = vperm.slane %v179, 0
    %v197 = vunpack.c.l.b16 %v163
    %v198 = vunpack.c.l.b16 %v164
    %v199 = vunpack.c.l.b16 %v165
    %v200 = vunpack.c.l.b16 %v166
    %v201 = vunpack.c.l.b16 %v167
    %v202 = vunpack.c.l.b16 %v168
    %v203 = vunpack.c.l.b16 %v169
    %v204 = vunpack.c.l.b16 %v170
    %v205 = vunpack.c.l.b16 %v171
    %v206 = vunpack.c.l.b16 %v172
    %v207 = vunpack.c.l.b16 %v173
    %v208 = vunpack.c.l.b16 %v174
    %v209 = vunpack.c.l.b16 %v175
    %v210 = vunpack.c.l.b16 %v176
    %v211 = vunpack.c.l.b16 %v177
    %v212 = vunpack.c.l.b16 %v178
    %v213 = vpack.c.b16 %v198, %v197
    %v214 = vpack.c.b16 %v200, %v199
    %v215 = vpack.c.b16 %v202, %v201
    %v216 = vpack.c.b16 %v204, %v203
    %v217 = vpack.c.b16 %v206, %v205
    %v218 = vpack.c.b16 %v208, %v207
    %v219 = vpack.c.b16 %v210, %v209
    %v220 = vpack.c.b16 %v212, %v211
    %229 = vmatpush.bf16.msra.mxu0 %v220
    %230 = vmatpush.bf16.msra.mxu0 %v219
    %231 = vmatpush.bf16.msra.mxu0 %v218
    %232 = vmatpush.bf16.msra.mxu0 %v217
    %233 = vmatpush.bf16.msra.mxu0 %v216
    %234 = vmatpush.bf16.msra.mxu0 %v215
    %235 = vmatpush.bf16.msra.mxu0 %v214
    %236 = vmatpush.bf16.msra.mxu0 %v213
    %237 = vmatmul.bf16.gmra.mxu0 %v155
    %v238 = vpop.f32.mrf.mxu0
    %v239 = vadd.f32 %v180, %v238
    %v240 = vpop.f32.mrf.mxu0
    %v241 = vadd.f32 %v180, %v240
    %242 = vmatmul.bf16.gmra.mxu0 %v156
    %v243 = vpop.f32.mrf.mxu0
    %v244 = vadd.f32 %v180, %v243
    %v245 = vpop.f32.mrf.mxu0
    %v246 = vadd.f32 %v180, %v245
    %247 = vmatmul.bf16.gmra.mxu0 %v157
    %v248 = vpop.f32.mrf.mxu0
    %v249 = vadd.f32 %v180, %v248
    %v250 = vpop.f32.mrf.mxu0
    %v251 = vadd.f32 %v180, %v250
    %252 = vmatmul.bf16.gmra.mxu0 %v158
    %v253 = vpop.f32.mrf.mxu0
    %v254 = vadd.f32 %v180, %v253
    %v255 = vpop.f32.mrf.mxu0
    %v256 = vadd.f32 %v180, %v255
    %257 = vmatmul.bf16.gmra.mxu0 %v159
    %v258 = vpop.f32.mrf.mxu0
    %v259 = vadd.f32 %v180, %v258
    %v260 = vpop.f32.mrf.mxu0
    %v261 = vadd.f32 %v180, %v260
    %262 = vmatmul.bf16.gmra.mxu0 %v160
    %v263 = vpop.f32.mrf.mxu0
    %v264 = vadd.f32 %v180, %v263
    %v265 = vpop.f32.mrf.mxu0
    %v266 = vadd.f32 %v180, %v265
    %267 = vmatmul.bf16.gmra.mxu0 %v161
    %v268 = vpop.f32.mrf.mxu0
    %v269 = vadd.f32 %v180, %v268
    %v270 = vpop.f32.mrf.mxu0
    %v271 = vadd.f32 %v180, %v270
    %272 = vmatmul.bf16.gmra.mxu0 %v162
    %v273 = vpop.f32.mrf.mxu0
    %v274 = vadd.f32 %v180, %v273
    %v275 = vpop.f32.mrf.mxu0
    %v276 = vadd.f32 %v180, %v275
    %277 = vdwg.mxu0
    %v278 = vtanh.pop %v239
    %v279 = vtanh.pop %v241
    %v280 = vtanh.pop %v244
    %v281 = vtanh.pop %v246
    %v282 = vtanh.pop %v249
    %v283 = vtanh.pop %v251
    %v284 = vtanh.pop %v254
    %v285 = vtanh.pop %v256
    %v286 = vtanh.pop %v259
    %v287 = vtanh.pop %v261
    %v288 = vtanh.pop %v264
    %v289 = vtanh.pop %v266
    %v290 = vtanh.pop %v269
    %v291 = vtanh.pop %v271
    %v292 = vtanh.pop %v274
    %v293 = vtanh.pop %v276
    %v294 = vld [vmem:[%s3] sm:$0xf]
    %v295 = vld [vmem:[%s3 + $0x4] sm:$0xf]
    %v296 = vpack.c.bf16 %v279, %v278
    %v297 = vpack.c.bf16 %v281, %v280
    %v298 = vpack.c.bf16 %v283, %v282
    %v299 = vpack.c.bf16 %v285, %v284
    %v300 = vpack.c.bf16 %v287, %v286
    %v301 = vpack.c.bf16 %v289, %v288
    %v302 = vpack.c.bf16 %v291, %v290
    %v303 = vpack.c.bf16 %v293, %v292
    %v304 = vld [vmem:[%s5] sm:$0xff]
    %v305 = vld [vmem:[%s5 + $0x8] sm:$0xff]
    %307 = vset.pattern.permute.xlu0 0
    %308 = vperm.xlu0 %307, %v304
    %v309 = vpop.permute.xlu0 %308
    %312 = vset.pattern.permute.xlu0 0
    %313 = vperm.xlu0 %312, %v305
    %v314 = vpop.permute.xlu0 %313
    %v318 = vunpack.c.l.b16 %v294
    %v319 = vunpack.c.l.b16 %v295
    %v320 = vpack.c.b16 %v319, %v318
    %322 = vmatpush.bf16.xpose.msra.mxu0 %v303
    %323 = vmatpush.bf16.xpose.msra.mxu0 %v302
    %324 = vmatpush.bf16.xpose.msra.mxu0 %v301
    %325 = vmatpush.bf16.xpose.msra.mxu0 %v300
    %326 = vmatpush.bf16.xpose.msra.mxu0 %v299
    %327 = vmatpush.bf16.xpose.msra.mxu0 %v298
    %328 = vmatpush.bf16.xpose.msra.mxu0 %v297
    %329 = vmatpush.bf16.xpose.msra.mxu0 %v296
    %330 = vmatmul.bf16.gmra.mxu0 %v320
    %v331 = vpop.f32.mrf.mxu0
    %v332 = vadd.f32 %v309, %v331
    %v333 = vpop.f32.mrf.mxu0
    %v334 = vadd.f32 %v314, %v333
    %335 = vdwg.mxu0
    %v336 = vtanh.pop %v332
    %v337 = vtanh.pop %v334
    %v338 = vpack.c.bf16 %v336, %v336
    %v339 = vpack.c.bf16 %v337, %v337
    %340 = vst [vmem:[#allocation2] sm:$0xf] %v338
    %341 = vst [vmem:[#allocation2 + $0x4] sm:$0xf] %v339
    // Predicated region
    $region26: #{tpu_custom_call.1} parent=1 // pred_check
      _
    $region27: #{tpu_custom_call.1} parent=1 // pred_check_branch
      %343 = sbr.rel (0) target = $region29
    $region28: #{tpu_custom_call.1} parent=1 // pred_region
      %345 = vsyncadd [#allocation3], 0
      %s346 = sshll.u32 [#allocation2], 4
      %s347 = int_to_ptr.vmem [resolvable:$true] %s346
      %s348 = sshll.u32 %s6, 4
      %s349 = int_to_ptr.hbm [resolvable:$true] %s348
      %354 = dma.vmem_to_hbm [thread:$0]  %s347, 128, %s349, [#allocation3], 64, 64, 4
    $region29: #{tpu_custom_call.1} parent=1 // pred_fallthru
      _
    // Predicated region
    $region30: #{tpu_custom_call.1} parent=1 // pred_check
      _
    $region31: #{tpu_custom_call.1} parent=1 // pred_check_branch
      %356 = sbr.rel (0) target = $region33
    $region32: #{tpu_custom_call.1} parent=1 // pred_region
      %358 = dma.done [#allocation3], 128
    $region33: #{tpu_custom_call.1} parent=1 // pred_fallthru
      _
    %359 = vsyncpa [#allocation3], 1

</llo_original>
